<compile_context>
chip_gen: v7x
topology: tpu7x:2x2x1
jax: 0.10.0
libtpu: 0.0.40
codegen_flags: <defaults>
</compile_context>

<pallas_src>
import functools

import jax
import jax.numpy as jnp
from jax.experimental import pallas as pl
from jax.experimental.pallas import tpu as pltpu


def _round_up(n, m):
    return ((n + m - 1) // m) * m


# ----------------------------------------------------------------------------
# Pallas kernel: one SAGEConv layer, tiled over (row tiles x reduction tiles)
# ----------------------------------------------------------------------------
def _sage_kernel(a_ref, inv_ref, xs_ref, xt_ref, *refs, apply_relu,
                 fused_weights):
    if fused_weights:
        w_ref, b_ref, o_ref, acc_ref = refs
    else:
        b_ref, o_ref, acc_ref = refs

    k = pl.program_id(1)

    @pl.when(k == 0)
    def _init():
        acc_ref[...] = jnp.zeros_like(acc_ref)

    # Inner loop: pure bf16 MXU matmul, f32 accumulation (unnormalized sum
    # over neighbors of the current src tile).
    acc_ref[...] += jnp.dot(a_ref[...], xs_ref[...],
                            preferred_element_type=jnp.float32)

    @pl.when(k == pl.num_programs(1) - 1)
    def _finalize():
        # Mean normalization: per-target-row 1/deg, f32.
        agg = acc_ref[...] * inv_ref[...]
        if fused_weights:
            # Fused neighbor + root transform: one K = 2*c_in matmul.
            cat = jnp.concatenate(
                [agg.astype(jnp.bfloat16), xt_ref[...]], axis=-1)
            out = jnp.dot(cat, w_ref[...],
                          preferred_element_type=jnp.float32) + b_ref[...]
        else:
            # Features were pre-transformed (x @ W hoisted before aggregation).
            out = agg + xt_ref[...] + b_ref[...]
        if apply_relu:
            out = jnp.maximum(out, 0.0)
        # dropout(p=0.5, training=False) is identity in eval mode.
        o_ref[...] = out.astype(o_ref.dtype)


def sage_conv_pallas(counts, inv_deg, x_src, x_tgt, w_l, b_l, w_r, *,
                     apply_relu):
    """One SAGEConv layer.  counts: f32 [n_tgt, n_src] edge counts,
    inv_deg: f32 [n_tgt, 1].  Returns f32 [n_tgt, hidden]."""
    n_tgt, n_src = counts.shape
    c_in = x_src.shape[1]
    hidden = w_l.shape[1]

    bf16 = jnp.bfloat16

    # Lane-dense (128-multiple) feature dims.
    c_in_p = _round_up(c_in, 128)
    hidden_p = _round_up(hidden, 128)

    # Matmul reassociation: make the dominant A matmul use the smaller K.
    pre_transform = hidden_p < c_in_p
    feat_p = hidden_p if pre_transform else c_in_p

    # Node tiles: multiples of 16 (bf16 sublanes) / 128 (A lane dim).
    tm = min(256, _round_up(n_tgt, 16))
    tk = min(512, _round_up(n_src, 128))
    n_tgt_p = _round_up(n_tgt, tm)
    n_src_p = _round_up(n_src, tk)

    # Adjacency counts in bf16 (exact small integers), 1/deg stays f32.
    a_p = jnp.pad(counts,
                  ((0, n_tgt_p - n_tgt), (0, n_src_p - n_src))).astype(bf16)
    inv_p = jnp.pad(inv_deg, ((0, n_tgt_p - n_tgt), (0, 0))).astype(jnp.float32)
    b_p = jnp.pad(b_l, ((0, 0), (0, hidden_p - hidden))).astype(jnp.float32)

    if pre_transform:
        # Hoist the (cheap, n_src x c_in x hidden) feature transforms so the
        # big A matmul has K = hidden_p < c_in_p.
        h_src = jnp.dot(x_src.astype(bf16), w_l.astype(bf16),
                        preferred_element_type=jnp.float32)
        h_tgt = jnp.dot(x_tgt.astype(bf16), w_r.astype(bf16),
                        preferred_element_type=jnp.float32)
        xs_in = jnp.pad(h_src, ((0, n_src_p - n_src),
                                (0, hidden_p - hidden))).astype(bf16)
        xt_in = jnp.pad(h_tgt, ((0, n_tgt_p - n_tgt),
                                (0, hidden_p - hidden)))            # f32
        extra_in = []
        extra_specs = []
        xt_cols = hidden_p
    else:
        xs_in = jnp.pad(x_src, ((0, n_src_p - n_src),
                                (0, c_in_p - c_in))).astype(bf16)
        xt_in = jnp.pad(x_tgt, ((0, n_tgt_p - n_tgt),
                                (0, c_in_p - c_in))).astype(bf16)
        w_cat = jnp.concatenate([
            jnp.pad(w_l, ((0, c_in_p - c_in), (0, hidden_p - hidden))),
            jnp.pad(w_r, ((0, c_in_p - c_in), (0, hidden_p - hidden))),
        ], axis=0).astype(bf16)
        extra_in = [w_cat]
        extra_specs = [pl.BlockSpec((2 * c_in_p, hidden_p),
                                    lambda i, k: (0, 0))]
        xt_cols = c_in_p

    kernel = functools.partial(_sage_kernel, apply_relu=apply_relu,
                               fused_weights=not pre_transform)

    grid = (n_tgt_p // tm, n_src_p // tk)

    out = pl.pallas_call(
        kernel,
        out_shape=jax.ShapeDtypeStruct((n_tgt_p, hidden_p), jnp.float32),
        grid=grid,
        in_specs=[
            pl.BlockSpec((tm, tk), lambda i, k: (i, k)),        # A counts tile
            pl.BlockSpec((tm, 1), lambda i, k: (i, 0)),         # 1/deg column
            pl.BlockSpec((tk, feat_p), lambda i, k: (k, 0)),    # src features
            pl.BlockSpec((tm, xt_cols), lambda i, k: (i, 0)),   # tgt features
            *extra_specs,                                       # fused weights
            pl.BlockSpec((1, hidden_p), lambda i, k: (0, 0)),   # bias
        ],
        out_specs=pl.BlockSpec((tm, hidden_p), lambda i, k: (i, 0)),
        scratch_shapes=[pltpu.VMEM((tm, feat_p), jnp.float32)],
        compiler_params=pltpu.CompilerParams(
            dimension_semantics=("parallel", "arbitrary"),
            vmem_limit_bytes=64 * 1024 * 1024),
    )(a_p, inv_p, xs_in, xt_in, *extra_in, b_p)

    return out[:n_tgt, :hidden]


# ----------------------------------------------------------------------------
# Glue: edge_index -> dense edge-count matrix + per-row 1/deg (plain JAX)
# ----------------------------------------------------------------------------
def build_counts_and_inv_deg(edge_index, n_src, n_tgt):
    """edge_index: int32 [2, E], row 0 = source, row 1 = target."""
    src, tgt = edge_index[0], edge_index[1]
    counts = jnp.zeros((n_tgt, n_src), jnp.float32).at[tgt, src].add(1.0)
    deg = counts.sum(axis=1, keepdims=True)
    inv_deg = 1.0 / jnp.maximum(deg, 1.0)
    return counts, inv_deg


# ----------------------------------------------------------------------------
# SAGE module (parameters + forward over sampled adjs)
# ----------------------------------------------------------------------------
def init_sage_params(key, in_channels, hidden_channels, num_layers):
    params = []
    for i in range(num_layers):
        c_in = in_channels if i == 0 else hidden_channels
        key, k1, k2 = jax.random.split(key, 3)
        scale = 1.0 / jnp.sqrt(jnp.float32(c_in))
        w_l = jax.random.uniform(k1, (c_in, hidden_channels), jnp.float32,
                                 -scale, scale)
        w_r = jax.random.uniform(k2, (c_in, hidden_channels), jnp.float32,
                                 -scale, scale)
        b_l = jnp.zeros((1, hidden_channels), jnp.float32)
        params.append((w_l, b_l, w_r))
    return params


def sage_forward(params, x, adjs):
    """adjs: list of (edge_index, e_id, size) like PyG NeighborSampler."""
    num_layers = len(params)
    for i, (edge_index, _, size) in enumerate(adjs):
        n_src, n_tgt = size
        x_src = x[:n_src]
        x_tgt = x[:n_tgt]
        counts, inv_deg = build_counts_and_inv_deg(edge_index, n_src, n_tgt)
        w_l, b_l, w_r = params[i]
        x = sage_conv_pallas(counts, inv_deg, x_src, x_tgt, w_l, b_l, w_r,
                             apply_relu=(i != num_layers - 1))
    return x


# ----------------------------------------------------------------------------
# Pure-JAX reference (f32 math on bf16-rounded inputs, matching kernel inputs)
# ----------------------------------------------------------------------------
def sage_forward_ref(params, x, adjs):
    def bf(t):
        return t.astype(jnp.bfloat16).astype(jnp.float32)

    num_layers = len(params)
    for i, (edge_index, _, size) in enumerate(adjs):
        n_src, n_tgt = size
        x_src, x_tgt = bf(x[:n_src]), bf(x[:n_tgt])
        counts, inv_deg = build_counts_and_inv_deg(edge_index, n_src, n_tgt)
        w_l, b_l, w_r = params[i]
        agg = (counts @ x_src) * inv_deg
        x = agg @ bf(w_l) + b_l + x_tgt @ bf(w_r)
        if i != num_layers - 1:
            x = jnp.maximum(x, 0.0)
    return x


# ----------------------------------------------------------------------------
# Demo / correctness check
# ----------------------------------------------------------------------------
def _make_case(key, in_channels, hidden_channels, num_layers, node_counts,
               edge_counts):
    keys = jax.random.split(key, 2 + 2 * len(edge_counts))
    x = jax.random.normal(keys[0], (node_counts[0], in_channels), jnp.float32)
    adjs = []
    for li, e in enumerate(edge_counts):
        n_src, n_tgt = node_counts[li], node_counts[li + 1]
        ks, kt = keys[2 + 2 * li], keys[3 + 2 * li]
        edge_index = jnp.stack([
            jax.random.randint(ks, (e,), 0, n_src),
            jax.random.randint(kt, (e,), 0, n_tgt),
        ]).astype(jnp.int32)
        adjs.append((edge_index, None, (n_src, n_tgt)))
    params = init_sage_params(keys[1], in_channels, hidden_channels,
                              num_layers)
    return params, x, adjs


if __name__ == "__main__":
    key = jax.random.PRNGKey(0)
    k1, k2 = jax.random.split(key)

    # Case 1: small dims (c_in <= hidden) -> fused-weight finalize path.
    params1, x1, adjs1 = _make_case(k1, in_channels=16, hidden_channels=32,
                                    num_layers=2, node_counts=(32, 16, 8),
                                    edge_counts=(96, 48))
    out1 = jax.block_until_ready(sage_forward(params1, x1, adjs1))
    ref1 = sage_forward_ref(params1, x1, adjs1)
    assert out1.shape == (8, 32), out1.shape
    assert jnp.allclose(out1, ref1, atol=2e-2, rtol=2e-2), (
        "case 1 mismatch vs reference")

    # Case 2: wide input features (hidden < c_in) -> pre-transform
    # (reassociated) path in layer 0, fused path in layer 1.
    params2, x2, adjs2 = _make_case(k2, in_channels=192, hidden_channels=64,
                                    num_layers=2, node_counts=(40, 24, 8),
                                    edge_counts=(120, 64))
    out2 = jax.block_until_ready(sage_forward(params2, x2, adjs2))
    ref2 = sage_forward_ref(params2, x2, adjs2)
    assert out2.shape == (8, 64), out2.shape
    assert jnp.allclose(out2, ref2, atol=2e-2, rtol=2e-2), (
        "case 2 mismatch vs reference")

    print("KERNEL_OK")
</pallas_src>

<mosaic_0001>
module attributes {stable_mosaic.version = 11 : i64} {
  func.func @_sage_kernel(%arg0: i32, %arg1: i32, %arg2: memref<16x128xbf16, #tpu.memory_space<vmem>>, %arg3: memref<16x1xf32, #tpu.memory_space<vmem>>, %arg4: memref<128x128xbf16, #tpu.memory_space<vmem>>, %arg5: memref<16x128xbf16, #tpu.memory_space<vmem>>, %arg6: memref<256x128xbf16, #tpu.memory_space<vmem>>, %arg7: memref<1x128xf32, #tpu.memory_space<vmem>>, %arg8: memref<16x128xf32, #tpu.memory_space<vmem>>, %arg9: memref<16x128xf32, #tpu.memory_space<vmem>>) attributes {dimension_semantics = [#tpu.dimension_semantics<parallel>, #tpu.dimension_semantics<arbitrary>], iteration_bounds = array<i64: 1, 1>, scalar_prefetch = 0 : i64, scratch_operands = 1 : i64, tpu.core_type = #tpu.core_type<tc>, window_params = [{transform_indices = @transform_0, window_bounds = array<i64: 16, 128>}, {transform_indices = @transform_1, window_bounds = array<i64: 16, 1>}, {transform_indices = @transform_2, window_bounds = array<i64: 128, 128>}, {transform_indices = @transform_3, window_bounds = array<i64: 16, 128>}, {pipeline_mode = #tpu.pipeline_mode<synchronous>, transform_indices = @transform_4, window_bounds = array<i64: 256, 128>}, {pipeline_mode = #tpu.pipeline_mode<synchronous>, transform_indices = @transform_5, window_bounds = array<i64: 1, 128>}, {transform_indices = @transform_6, window_bounds = array<i64: 16, 128>}]} {
    %c0_i32 = arith.constant 0 : i32
    %0 = arith.cmpi eq, %arg1, %c0_i32 : i32
    %1 = arith.extui %0 : i1 to i32
    %c0_i32_0 = arith.constant 0 : i32
    %2 = arith.cmpi ne, %1, %c0_i32_0 : i32
    scf.if %2 {
      %cst_10 = arith.constant 0.000000e+00 : f32
      %12 = vector.broadcast %cst_10 : f32 to vector<16x128xf32>
      %c0_11 = arith.constant 0 : index
      %c0_12 = arith.constant 0 : index
      %13 = vector.load %arg9[%c0_11, %c0_12] : memref<16x128xf32, #tpu.memory_space<vmem>>, vector<16x128xf32>
      tpu.vector_store %arg9[%c0_11, %c0_12], %12 {strides = array<i32>} : memref<16x128xf32, #tpu.memory_space<vmem>>, vector<16x128xf32>,
    } else {
    }
    %c0 = arith.constant 0 : index
    %c0_1 = arith.constant 0 : index
    %3 = vector.load %arg9[%c0, %c0_1] : memref<16x128xf32, #tpu.memory_space<vmem>>, vector<16x128xf32>
    %c0_2 = arith.constant 0 : index
    %c0_3 = arith.constant 0 : index
    %4 = vector.load %arg2[%c0_2, %c0_3] : memref<16x128xbf16, #tpu.memory_space<vmem>>, vector<16x128xbf16>
    %c0_4 = arith.constant 0 : index
    %c0_5 = arith.constant 0 : index
    %5 = vector.load %arg4[%c0_4, %c0_5] : memref<128x128xbf16, #tpu.memory_space<vmem>>, vector<128x128xbf16>
    %cst = arith.constant dense<0.000000e+00> : vector<16x128xf32>
    %6 = tpu.matmul %4, %5, %cst {dimension_numbers = #tpu.dot_dimension_numbers<[1], [0], [0], [1], [0, 0, 1, 1], [], []>} : vector<16x128xbf16>, vector<128x128xbf16>, vector<16x128xf32> -> vector<16x128xf32>
    %7 = arith.addf %3, %6 : vector<16x128xf32>
    %c0_6 = arith.constant 0 : index
    %c0_7 = arith.constant 0 : index
    %8 = vector.load %arg9[%c0_6, %c0_7] : memref<16x128xf32, #tpu.memory_space<vmem>>, vector<16x128xf32>
    tpu.vector_store %arg9[%c0_6, %c0_7], %7 {strides = array<i32>} : memref<16x128xf32, #tpu.memory_space<vmem>>, vector<16x128xf32>,
    %c0_i32_8 = arith.constant 0 : i32
    %9 = arith.cmpi eq, %arg1, %c0_i32_8 : i32
    %10 = arith.extui %9 : i1 to i32
    %c0_i32_9 = arith.constant 0 : i32
    %11 = arith.cmpi ne, %10, %c0_i32_9 : i32
    scf.if %11 {
      %c0_10 = arith.constant 0 : index
      %c0_11 = arith.constant 0 : index
      %12 = vector.load %arg9[%c0_10, %c0_11] : memref<16x128xf32, #tpu.memory_space<vmem>>, vector<16x128xf32>
      %c0_12 = arith.constant 0 : index
      %c0_13 = arith.constant 0 : index
      %13 = vector.load %arg3[%c0_12, %c0_13] : memref<16x1xf32, #tpu.memory_space<vmem>>, vector<16x1xf32>
      %14 = vector.broadcast %13 : vector<16x1xf32> to vector<16x128xf32>
      %15 = arith.mulf %12, %14 : vector<16x128xf32>
      %16 = arith.truncf %15 : vector<16x128xf32> to vector<16x128xbf16>
      %c0_14 = arith.constant 0 : index
      %c0_15 = arith.constant 0 : index
      %17 = vector.load %arg5[%c0_14, %c0_15] : memref<16x128xbf16, #tpu.memory_space<vmem>>, vector<16x128xbf16>
      %18 = tpu.concatenate %16, %17 in 1 : vector<16x128xbf16>, vector<16x128xbf16> -> vector<16x256xbf16>
      %c0_16 = arith.constant 0 : index
      %c0_17 = arith.constant 0 : index
      %19 = vector.load %arg6[%c0_16, %c0_17] : memref<256x128xbf16, #tpu.memory_space<vmem>>, vector<256x128xbf16>
      %cst_18 = arith.constant dense<0.000000e+00> : vector<16x128xf32>
      %20 = tpu.matmul %18, %19, %cst_18 {dimension_numbers = #tpu.dot_dimension_numbers<[1], [0], [0], [1], [0, 0, 1, 1], [], []>} : vector<16x256xbf16>, vector<256x128xbf16>, vector<16x128xf32> -> vector<16x128xf32>
      %c0_19 = arith.constant 0 : index
      %c0_20 = arith.constant 0 : index
      %21 = vector.load %arg7[%c0_19, %c0_20] : memref<1x128xf32, #tpu.memory_space<vmem>>, vector<1x128xf32>
      %22 = vector.broadcast %21 : vector<1x128xf32> to vector<16x128xf32>
      %23 = arith.addf %20, %22 : vector<16x128xf32>
      %cst_21 = arith.constant 0.000000e+00 : f32
      %24 = vector.broadcast %cst_21 : f32 to vector<16x128xf32>
      %25 = arith.maximumf %23, %24 : vector<16x128xf32>
      %c0_22 = arith.constant 0 : index
      %c0_23 = arith.constant 0 : index
      %26 = vector.load %arg8[%c0_22, %c0_23] : memref<16x128xf32, #tpu.memory_space<vmem>>, vector<16x128xf32>
      tpu.vector_store %arg8[%c0_22, %c0_23], %25 {strides = array<i32>} : memref<16x128xf32, #tpu.memory_space<vmem>>, vector<16x128xf32>,
    } else {
    }
    return
  }
  func.func @transform_0(%arg0: i32, %arg1: i32) -> (i32, i32) {
    %c0_i32 = arith.constant 0 : i32
    return %arg0, %arg1 : i32, i32
  }
  func.func @transform_1(%arg0: i32, %arg1: i32) -> (i32, i32) {
    %c0_i32 = arith.constant 0 : i32
    %c0_i32_0 = arith.constant 0 : i32
    return %arg0, %c0_i32 : i32, i32
  }
  func.func @transform_2(%arg0: i32, %arg1: i32) -> (i32, i32) {
    %c0_i32 = arith.constant 0 : i32
    %c0_i32_0 = arith.constant 0 : i32
    return %arg1, %c0_i32 : i32, i32
  }
  func.func @transform_3(%arg0: i32, %arg1: i32) -> (i32, i32) {
    %c0_i32 = arith.constant 0 : i32
    %c0_i32_0 = arith.constant 0 : i32
    return %arg0, %c0_i32 : i32, i32
  }
  func.func @transform_4(%arg0: i32, %arg1: i32) -> (i32, i32) {
    %c0_i32 = arith.constant 0 : i32
    %c0_i32_0 = arith.constant 0 : i32
    %c0_i32_1 = arith.constant 0 : i32
    return %c0_i32, %c0_i32_0 : i32, i32
  }
  func.func @transform_5(%arg0: i32, %arg1: i32) -> (i32, i32) {
    %c0_i32 = arith.constant 0 : i32
    %c0_i32_0 = arith.constant 0 : i32
    %c0_i32_1 = arith.constant 0 : i32
    return %c0_i32, %c0_i32_0 : i32, i32
  }
  func.func @transform_6(%arg0: i32, %arg1: i32) -> (i32, i32) {
    %c0_i32 = arith.constant 0 : i32
    %c0_i32_0 = arith.constant 0 : i32
    return %arg0, %c0_i32 : i32, i32
  }
}

</mosaic_0001>

<llo_original>
// kernel: tpu_custom_call.1
$region0: #{tpu_custom_call.1}
  #allocation0 [shape = 'u32[]', space=smem, size = 0x4, offset = 0x4, fixed_abs, tag = 'smem constant byte address 0x4 - core index']
  #allocation1 [shape = 'u32[144,128]{1,0:T(1,128)}', space=vmem, size = 0x12000, scoped, tag = 'internal scratch']
  #allocation2 [shape = 'f32[16,128]{1,0:T(8,128)}', space=vmem, size = 0x2000, scoped, tag = 'scratch operand']
  %s0 = inlined_call_operand.hbm [shape: bf16[16,128], index: 0, kind: input, shape index: {}]
  %s1 = inlined_call_operand.hbm [shape: f32[16,1], index: 1, kind: input, shape index: {}]
  %s2 = inlined_call_operand.hbm [shape: bf16[128,128], index: 2, kind: input, shape index: {}]
  %s3 = inlined_call_operand.hbm [shape: bf16[16,128], index: 3, kind: input, shape index: {}]
  %s4 = inlined_call_operand.hbm [shape: bf16[256,128], index: 4, kind: input, shape index: {}]
  %s5 = inlined_call_operand.hbm [shape: f32[1,128], index: 5, kind: input, shape index: {}]
  %s6 = inlined_call_operand.hbm [shape: f32[16,128], index: 6, kind: output, shape index: {}]
  %s7 = sld [smem:[#allocation0]]
  $region66: #{tpu_custom_call.1} parent=0
    _
  %s9 = ssub.s32 1, %s7
  %s10 = scalar_select 0, %s9, %s7
  $region1: #{tpu_custom_call.1} parent=0
    #allocation3 [shape = 'u8[4096]{0}', space=vmem, size = 0x1000, scoped, tag = 'input window, operand 0, single buffered']
    #allocation4 [shape = 's32[1]{0}', space=sflag, size = 0x4, scoped, tag = 'scoped memory for tpu_custom_call.1']
    #allocation5 [shape = 's32[1]{0}', space=sflag, size = 0x4, scoped, tag = 'scoped memory for tpu_custom_call.1']
    #allocation6 [shape = 'u8[8192]{0}', space=vmem, size = 0x2000, scoped, tag = 'input window, operand 1, single buffered']
    #allocation7 [shape = 's32[1]{0}', space=sflag, size = 0x4, scoped, tag = 'scoped memory for tpu_custom_call.1']
    #allocation8 [shape = 'u8[32768]{0}', space=vmem, size = 0x8000, scoped, tag = 'input window, operand 2, single buffered']
    #allocation9 [shape = 'u8[4096]{0}', space=vmem, size = 0x1000, scoped, tag = 'input window, operand 3, single buffered']
    #allocation10 [shape = 's32[1]{0}', space=sflag, size = 0x4, scoped, tag = 'scoped memory for tpu_custom_call.1']
    #allocation11 [shape = 'u8[65536]{0}', space=vmem, size = 0x10000, scoped, tag = 'input window, operand 4, single buffered']
    #allocation12 [shape = 'u8[512]{0}', space=vmem, size = 0x400, scoped, tag = 'input window, operand 5, single buffered']
    #allocation13 [shape = 's32[1]{0}', space=sflag, size = 0x4, scoped, tag = 'scoped memory for tpu_custom_call.1']
    #allocation14 [shape = 'u8[8192]{0}', space=vmem, size = 0x2000, scoped, tag = 'output window, operand 0, single buffered']
    %11 = vsyncpa [#allocation4], 0
    %12 = vsyncpa [#allocation7], 0
    %13 = vsyncpa [#allocation10], 0
    %14 = vsyncpa [#allocation13], 0
    %15 = vsyncpa [#allocation5], 0
    // Predicated region
    $region2: #{tpu_custom_call.1} parent=1 // pred_check
      _
    $region3: #{tpu_custom_call.1} parent=1 // pred_check_branch
      %17 = sbr.rel (0) target = $region5
    $region4: #{tpu_custom_call.1} parent=1 // pred_region
      %s19 = ssub.s32 128, 128
      %20 = vsyncadd [#allocation4], %s19
      %s21 = sshll.u32 [#allocation3], 4
      %s22 = int_to_ptr.vmem [resolvable:$true] %s21
      %27 = dma.hbm_to_vmem [thread:$0]  %s0, 128, %s22, [#allocation4], 64, 64, 4
    $region5: #{tpu_custom_call.1} parent=1 // pred_fallthru
      _
    // Predicated region
    $region6: #{tpu_custom_call.1} parent=1 // pred_check
      _
    $region7: #{tpu_custom_call.1} parent=1 // pred_check_branch
      %29 = sbr.rel (0) target = $region9
    $region8: #{tpu_custom_call.1} parent=1 // pred_region
      %s31 = ssub.s32 256, 256
      %32 = vsyncadd [#allocation7], %s31
      %s33 = sshll.u32 [#allocation6], 4
      %s34 = int_to_ptr.vmem [resolvable:$true] %s33
      %39 = dma.hbm_to_vmem [thread:$0]  %s1, 256, %s34, [#allocation7], 128, 128, 8
    $region9: #{tpu_custom_call.1} parent=1 // pred_fallthru
      _
    // Predicated region
    $region10: #{tpu_custom_call.1} parent=1 // pred_check
      _
    $region11: #{tpu_custom_call.1} parent=1 // pred_check_branch
      %41 = sbr.rel (0) target = $region13
    $region12: #{tpu_custom_call.1} parent=1 // pred_region
      %s43 = ssub.s32 1024, 1024
      %44 = vsyncadd [#allocation7], %s43
      %s45 = sshll.u32 [#allocation8], 4
      %s46 = int_to_ptr.vmem [resolvable:$true] %s45
      %51 = dma.hbm_to_vmem [thread:$0]  %s2, 1024, %s46, [#allocation7], 64, 64, 4
    $region13: #{tpu_custom_call.1} parent=1 // pred_fallthru
      _
    // Predicated region
    $region14: #{tpu_custom_call.1} parent=1 // pred_check
      _
    $region15: #{tpu_custom_call.1} parent=1 // pred_check_branch
      %53 = sbr.rel (0) target = $region17
    $region16: #{tpu_custom_call.1} parent=1 // pred_region
      %s55 = ssub.s32 128, 128
      %56 = vsyncadd [#allocation10], %s55
      %s57 = sshll.u32 [#allocation9], 4
      %s58 = int_to_ptr.vmem [resolvable:$true] %s57
      %63 = dma.hbm_to_vmem [thread:$0]  %s3, 128, %s58, [#allocation10], 64, 64, 4
    $region17: #{tpu_custom_call.1} parent=1 // pred_fallthru
      _
    // Predicated region
    $region18: #{tpu_custom_call.1} parent=1 // pred_check
      _
    $region19: #{tpu_custom_call.1} parent=1 // pred_check_branch
      %65 = sbr.rel (0) target = $region21
    $region20: #{tpu_custom_call.1} parent=1 // pred_region
      %s67 = ssub.s32 2048, 2048
      %68 = vsyncadd [#allocation10], %s67
      %s69 = sshll.u32 [#allocation11], 4
      %s70 = int_to_ptr.vmem [resolvable:$true] %s69
      %75 = dma.hbm_to_vmem [thread:$0]  %s4, 2048, %s70, [#allocation10], 64, 64, 4
    $region21: #{tpu_custom_call.1} parent=1 // pred_fallthru
      _
    // Predicated region
    $region22: #{tpu_custom_call.1} parent=1 // pred_check
      _
    $region23: #{tpu_custom_call.1} parent=1 // pred_check_branch
      %77 = sbr.rel (0) target = $region25
    $region24: #{tpu_custom_call.1} parent=1 // pred_region
      %s79 = ssub.s32 16, 16
      %80 = vsyncadd [#allocation13], %s79
      %s82 = sshll.u32 [#allocation12], 4
      %s83 = int_to_ptr.vmem [resolvable:$true] %s82
      %85 = dma.hbm_to_vmem [thread:$0]  %s5, 16, %s83, [#allocation13]
    $region25: #{tpu_custom_call.1} parent=1 // pred_fallthru
      _
    // Predicated region
    $region26: #{tpu_custom_call.1} parent=1 // pred_check
      _
    $region27: #{tpu_custom_call.1} parent=1 // pred_check_branch
      %87 = sbr.rel (0) target = $region29
    $region28: #{tpu_custom_call.1} parent=1 // pred_region
      %88 = dma.done [#allocation4], 128
    $region29: #{tpu_custom_call.1} parent=1 // pred_fallthru
      _
    // Predicated region
    $region30: #{tpu_custom_call.1} parent=1 // pred_check
      _
    $region31: #{tpu_custom_call.1} parent=1 // pred_check_branch
      %90 = sbr.rel (0) target = $region33
    $region32: #{tpu_custom_call.1} parent=1 // pred_region
      %91 = dma.done [#allocation7], 256
    $region33: #{tpu_custom_call.1} parent=1 // pred_fallthru
      _
    // Predicated region
    $region34: #{tpu_custom_call.1} parent=1 // pred_check
      _
    $region35: #{tpu_custom_call.1} parent=1 // pred_check_branch
      %93 = sbr.rel (0) target = $region37
    $region36: #{tpu_custom_call.1} parent=1 // pred_region
      %94 = dma.done [#allocation7], 1024
    $region37: #{tpu_custom_call.1} parent=1 // pred_fallthru
      _
    // Predicated region
    $region38: #{tpu_custom_call.1} parent=1 // pred_check
      _
    $region39: #{tpu_custom_call.1} parent=1 // pred_check_branch
      %96 = sbr.rel (0) target = $region41
    $region40: #{tpu_custom_call.1} parent=1 // pred_region
      %97 = dma.done [#allocation10], 128
    $region41: #{tpu_custom_call.1} parent=1 // pred_fallthru
      _
    // Predicated region
    $region42: #{tpu_custom_call.1} parent=1 // pred_check
      _
    $region43: #{tpu_custom_call.1} parent=1 // pred_check_branch
      %99 = sbr.rel (0) target = $region45
    $region44: #{tpu_custom_call.1} parent=1 // pred_region
      %100 = dma.done [#allocation10], 2048
    $region45: #{tpu_custom_call.1} parent=1 // pred_fallthru
      _
    // Predicated region
    $region46: #{tpu_custom_call.1} parent=1 // pred_check
      _
    $region47: #{tpu_custom_call.1} parent=1 // pred_check_branch
      %102 = sbr.rel (0) target = $region49
    $region48: #{tpu_custom_call.1} parent=1 // pred_region
      %103 = dma.done [#allocation13], 16
    $region49: #{tpu_custom_call.1} parent=1 // pred_fallthru
      _
    %p105 = scmp.eq.s32.totalorder 0, 0
    // Predicated region
    $region50: #{tpu_custom_call.1} parent=1 // pred_check
      %p106 = pneg %p105
    $region51: #{tpu_custom_call.1} parent=1 // pred_check_branch
      %108 = sbr.rel (%p106) target = $region53
    $region52: #{tpu_custom_call.1} parent=1 // pred_region
      %109 = vst [vmem:[#allocation2] sm:$0xff] 0.0
      %110 = vst [vmem:[#allocation2 + $0x8] sm:$0xff] 0.0
    $region53: #{tpu_custom_call.1} parent=1 // pred_fallthru
      _
    %v111 = vld [vmem:[#allocation2] sm:$0xff]
    %v112 = vld [vmem:[#allocation2 + $0x8] sm:$0xff]
    %v113 = vld [vmem:[#allocation3] sm:$0xf]
    %v114 = vld [vmem:[#allocation3 + $0x4] sm:$0xf]
    %v115 = vld [vmem:[#allocation8] sm:$0xf]
    %v116 = vld [vmem:[#allocation8 + $0x4] sm:$0xf]
    %v117 = vld [vmem:[#allocation8 + $0x8] sm:$0xf]
    %v118 = vld [vmem:[#allocation8 + $0xc] sm:$0xf]
    %v119 = vld [vmem:[#allocation8 + $0x10] sm:$0xf]
    %v120 = vld [vmem:[#allocation8 + $0x14] sm:$0xf]
    %v121 = vld [vmem:[#allocation8 + $0x18] sm:$0xf]
    %v122 = vld [vmem:[#allocation8 + $0x1c] sm:$0xf]
    %v123 = vld [vmem:[#allocation8 + $0x20] sm:$0xf]
    %v124 = vld [vmem:[#allocation8 + $0x24] sm:$0xf]
    %v125 = vld [vmem:[#allocation8 + $0x28] sm:$0xf]
    %v126 = vld [vmem:[#allocation8 + $0x2c] sm:$0xf]
    %v127 = vld [vmem:[#allocation8 + $0x30] sm:$0xf]
    %v128 = vld [vmem:[#allocation8 + $0x34] sm:$0xf]
    %v129 = vld [vmem:[#allocation8 + $0x38] sm:$0xf]
    %v130 = vld [vmem:[#allocation8 + $0x3c] sm:$0xf]
    %v133 = vunpack.c.l.b16 %v113
    %v134 = vunpack.c.l.b16 %v114
    %v135 = vpack.c.b16 %v134, %v133
    %v153 = vunpack.c.l.b16 %v115
    %v154 = vunpack.c.l.b16 %v116
    %v155 = vunpack.c.l.b16 %v117
    %v156 = vunpack.c.l.b16 %v118
    %v157 = vunpack.c.l.b16 %v119
    %v158 = vunpack.c.l.b16 %v120
    %v159 = vunpack.c.l.b16 %v121
    %v160 = vunpack.c.l.b16 %v122
    %v161 = vunpack.c.l.b16 %v123
    %v162 = vunpack.c.l.b16 %v124
    %v163 = vunpack.c.l.b16 %v125
    %v164 = vunpack.c.l.b16 %v126
    %v165 = vunpack.c.l.b16 %v127
    %v166 = vunpack.c.l.b16 %v128
    %v167 = vunpack.c.l.b16 %v129
    %v168 = vunpack.c.l.b16 %v130
    %v169 = vpack.c.b16 %v154, %v153
    %v170 = vpack.c.b16 %v156, %v155
    %v171 = vpack.c.b16 %v158, %v157
    %v172 = vpack.c.b16 %v160, %v159
    %v173 = vpack.c.b16 %v162, %v161
    %v174 = vpack.c.b16 %v164, %v163
    %v175 = vpack.c.b16 %v166, %v165
    %v176 = vpack.c.b16 %v168, %v167
    %185 = vmatprep.subr.bf16.mxu0 0
    %186 = vmatpush1.bf16.msra.mxu0 %v169
    %187 = vmatprep.subr.bf16.mxu0 0
    %188 = vmatpush1.bf16.msra.mxu0 %v170
    %189 = vmatprep.subr.bf16.mxu0 0
    %190 = vmatpush1.bf16.msra.mxu0 %v171
    %191 = vmatprep.subr.bf16.mxu0 0
    %192 = vmatpush1.bf16.msra.mxu0 %v172
    %193 = vmatprep.subr.bf16.mxu0 0
    %194 = vmatpush1.bf16.msra.mxu0 %v173
    %195 = vmatprep.subr.bf16.mxu0 0
    %196 = vmatpush1.bf16.msra.mxu0 %v174
    %197 = vmatprep.subr.bf16.mxu0 0
    %198 = vmatpush1.bf16.msra.mxu0 %v175
    %199 = vmatprep.subr.bf16.mxu0 0
    %200 = vmatpush1.bf16.msra.mxu0 %v176
    %201 = vmatprep.subr.bf16.mxu0 0
    %202 = vmatpush1.bf16.msra.mxu0 0
    %203 = vmatprep.subr.bf16.mxu0 0
    %204 = vmatpush1.bf16.msra.mxu0 0
    %205 = vmatprep.subr.bf16.mxu0 0
    %206 = vmatpush1.bf16.msra.mxu0 0
    %207 = vmatprep.subr.bf16.mxu0 0
    %208 = vmatpush1.bf16.msra.mxu0 0
    %209 = vmatprep.subr.bf16.mxu0 0
    %210 = vmatpush1.bf16.msra.mxu0 0
    %211 = vmatprep.subr.bf16.mxu0 0
    %212 = vmatpush1.bf16.msra.mxu0 0
    %213 = vmatprep.subr.bf16.mxu0 0
    %214 = vmatpush1.bf16.msra.mxu0 0
    %215 = vmatprep.subr.bf16.mxu0 0
    %216 = vmatpush1.bf16.msra.mxu0 0
    %217 = vmatprep.mubr.bf16.mxu0 0
    %218 = vmatmul.mubr.bf16.gmra.mrb[0].mxu0 %v135
    %v219 = vpop.f32.mrb[0].mxu0
    %v220 = vadd.f32 0.0, %v219
    %v221 = vpop.f32.mrb[0].mxu0
    %v222 = vpop.f32.mrb[0].mxu0
    %v223 = vadd.f32 0.0, %v222
    %v224 = vpop.f32.mrb[0].mxu0
    %225 = vdwg.mxu0
    %v226 = vadd.f32 %v111, %v220
    %v227 = vadd.f32 %v112, %v223
    %228 = vst [vmem:[#allocation2] sm:$0xff] %v226
    %229 = vst [vmem:[#allocation2 + $0x8] sm:$0xff] %v227
    // Predicated region
    $region54: #{tpu_custom_call.1} parent=1 // pred_check
      %p230 = pneg %p105
    $region55: #{tpu_custom_call.1} parent=1 // pred_check_branch
      %232 = sbr.rel (%p230) target = $region57
    $region56: #{tpu_custom_call.1} parent=1 // pred_region
      %v233 = vld [vmem:[#allocation2] sm:$0xff]
      %v234 = vld [vmem:[#allocation2 + $0x8] sm:$0xff]
      %v235 = vld [vmem:[#allocation6] sm:$0xff]
      %v236 = vld [vmem:[#allocation6 + $0x8] sm:$0xff]
      %238 = vset.pattern.permute.xlu0 0
      %239 = vperm.xlu0 %238, %v235
      %v240 = vpop.permute.xlu0 %239
      %243 = vset.pattern.permute.xlu0 0
      %244 = vperm.xlu0 %243, %v236
      %v245 = vpop.permute.xlu0 %244
      %v247 = vmul.f32 %v233, %v240
      %v248 = vmul.f32 %v234, %v245
      %v249 = vpack.c.bf16 %v248, %v247
      %v250 = vld [vmem:[#allocation9] sm:$0xf]
      %v251 = vld [vmem:[#allocation9 + $0x4] sm:$0xf]
      %v254 = vunpack.c.l.b16 %v250
      %v255 = vunpack.c.l.b16 %v251
      %v256 = vpack.c.b16 %v255, %v254
      %v258 = vld [vmem:[#allocation11] sm:$0xf]
      %v259 = vld [vmem:[#allocation11 + $0x4] sm:$0xf]
      %v260 = vld [vmem:[#allocation11 + $0x8] sm:$0xf]
      %v261 = vld [vmem:[#allocation11 + $0xc] sm:$0xf]
      %v262 = vld [vmem:[#allocation11 + $0x10] sm:$0xf]
      %v263 = vld [vmem:[#allocation11 + $0x14] sm:$0xf]
      %v264 = vld [vmem:[#allocation11 + $0x18] sm:$0xf]
      %v265 = vld [vmem:[#allocation11 + $0x1c] sm:$0xf]
      %v266 = vld [vmem:[#allocation11 + $0x20] sm:$0xf]
      %v267 = vld [vmem:[#allocation11 + $0x24] sm:$0xf]
      %v268 = vld [vmem:[#allocation11 + $0x28] sm:$0xf]
      %v269 = vld [vmem:[#allocation11 + $0x2c] sm:$0xf]
      %v270 = vld [vmem:[#allocation11 + $0x30] sm:$0xf]
      %v271 = vld [vmem:[#allocation11 + $0x34] sm:$0xf]
      %v272 = vld [vmem:[#allocation11 + $0x38] sm:$0xf]
      %v273 = vld [vmem:[#allocation11 + $0x3c] sm:$0xf]
      %v274 = vld [vmem:[#allocation11 + $0x40] sm:$0xf]
      %v275 = vld [vmem:[#allocation11 + $0x44] sm:$0xf]
      %v276 = vld [vmem:[#allocation11 + $0x48] sm:$0xf]
      %v277 = vld [vmem:[#allocation11 + $0x4c] sm:$0xf]
      %v278 = vld [vmem:[#allocation11 + $0x50] sm:$0xf]
      %v279 = vld [vmem:[#allocation11 + $0x54] sm:$0xf]
      %v280 = vld [vmem:[#allocation11 + $0x58] sm:$0xf]
      %v281 = vld [vmem:[#allocation11 + $0x5c] sm:$0xf]
      %v282 = vld [vmem:[#allocation11 + $0x60] sm:$0xf]
      %v283 = vld [vmem:[#allocation11 + $0x64] sm:$0xf]
      %v284 = vld [vmem:[#allocation11 + $0x68] sm:$0xf]
      %v285 = vld [vmem:[#allocation11 + $0x6c] sm:$0xf]
      %v286 = vld [vmem:[#allocation11 + $0x70] sm:$0xf]
      %v287 = vld [vmem:[#allocation11 + $0x74] sm:$0xf]
      %v288 = vld [vmem:[#allocation11 + $0x78] sm:$0xf]
      %v289 = vld [vmem:[#allocation11 + $0x7c] sm:$0xf]
      %v290 = vld [vmem:[#allocation12] sm:$0x1]
      %v292 = vlaneseq
      %v293 = vshrl.u32 %v292, 7
      %v294 = vsub.s32 0, %v293
      %v295 = vrot.slane %v290, %v294
      %v329 = vunpack.c.l.b16 %v258
      %v330 = vunpack.c.l.b16 %v259
      %v331 = vunpack.c.l.b16 %v260
      %v332 = vunpack.c.l.b16 %v261
      %v333 = vunpack.c.l.b16 %v262
      %v334 = vunpack.c.l.b16 %v263
      %v335 = vunpack.c.l.b16 %v264
      %v336 = vunpack.c.l.b16 %v265
      %v337 = vunpack.c.l.b16 %v266
      %v338 = vunpack.c.l.b16 %v267
      %v339 = vunpack.c.l.b16 %v268
      %v340 = vunpack.c.l.b16 %v269
      %v341 = vunpack.c.l.b16 %v270
      %v342 = vunpack.c.l.b16 %v271
      %v343 = vunpack.c.l.b16 %v272
      %v344 = vunpack.c.l.b16 %v273
      %v345 = vunpack.c.l.b16 %v274
      %v346 = vunpack.c.l.b16 %v275
      %v347 = vunpack.c.l.b16 %v276
      %v348 = vunpack.c.l.b16 %v277
      %v349 = vunpack.c.l.b16 %v278
      %v350 = vunpack.c.l.b16 %v279
      %v351 = vunpack.c.l.b16 %v280
      %v352 = vunpack.c.l.b16 %v281
      %v353 = vunpack.c.l.b16 %v282
      %v354 = vunpack.c.l.b16 %v283
      %v355 = vunpack.c.l.b16 %v284
      %v356 = vunpack.c.l.b16 %v285
      %v357 = vunpack.c.l.b16 %v286
      %v358 = vunpack.c.l.b16 %v287
      %v359 = vunpack.c.l.b16 %v288
      %v360 = vunpack.c.l.b16 %v289
      %v361 = vpack.c.b16 %v330, %v329
      %v362 = vpack.c.b16 %v332, %v331
      %v363 = vpack.c.b16 %v334, %v333
      %v364 = vpack.c.b16 %v336, %v335
      %v365 = vpack.c.b16 %v338, %v337
      %v366 = vpack.c.b16 %v340, %v339
      %v367 = vpack.c.b16 %v342, %v341
      %v368 = vpack.c.b16 %v344, %v343
      %v369 = vpack.c.b16 %v346, %v345
      %v370 = vpack.c.b16 %v348, %v347
      %v371 = vpack.c.b16 %v350, %v349
      %v372 = vpack.c.b16 %v352, %v351
      %v373 = vpack.c.b16 %v354, %v353
      %v374 = vpack.c.b16 %v356, %v355
      %v375 = vpack.c.b16 %v358, %v357
      %v376 = vpack.c.b16 %v360, %v359
      %393 = vmatprep.subr.bf16.mxu0 0
      %394 = vmatpush1.bf16.msra.mxu0 %v361
      %395 = vmatprep.subr.bf16.mxu0 0
      %396 = vmatpush1.bf16.msra.mxu0 %v362
      %397 = vmatprep.subr.bf16.mxu0 0
      %398 = vmatpush1.bf16.msra.mxu0 %v363
      %399 = vmatprep.subr.bf16.mxu0 0
      %400 = vmatpush1.bf16.msra.mxu0 %v364
      %401 = vmatprep.subr.bf16.mxu0 0
      %402 = vmatpush1.bf16.msra.mxu0 %v365
      %403 = vmatprep.subr.bf16.mxu0 0
      %404 = vmatpush1.bf16.msra.mxu0 %v366
      %405 = vmatprep.subr.bf16.mxu0 0
      %406 = vmatpush1.bf16.msra.mxu0 %v367
      %407 = vmatprep.subr.bf16.mxu0 0
      %408 = vmatpush1.bf16.msra.mxu0 %v368
      %409 = vmatprep.subr.bf16.mxu0 0
      %410 = vmatpush1.bf16.msra.mxu0 %v369
      %411 = vmatprep.subr.bf16.mxu0 0
      %412 = vmatpush1.bf16.msra.mxu0 %v370
      %413 = vmatprep.subr.bf16.mxu0 0
      %414 = vmatpush1.bf16.msra.mxu0 %v371
      %415 = vmatprep.subr.bf16.mxu0 0
      %416 = vmatpush1.bf16.msra.mxu0 %v372
      %417 = vmatprep.subr.bf16.mxu0 0
      %418 = vmatpush1.bf16.msra.mxu0 %v373
      %419 = vmatprep.subr.bf16.mxu0 0
      %420 = vmatpush1.bf16.msra.mxu0 %v374
      %421 = vmatprep.subr.bf16.mxu0 0
      %422 = vmatpush1.bf16.msra.mxu0 %v375
      %423 = vmatprep.subr.bf16.mxu0 0
      %424 = vmatpush1.bf16.msra.mxu0 %v376
      %425 = vmatprep.mubr.bf16.mxu0 %v256
      %426 = vmatmul.mubr.bf16.gmra.mrb[0].mxu0 %v249
      %v427 = vpop.f32.mrb[0].mxu0
      %v428 = vadd.f32 %v295, %v427
      %v429 = vpop.f32.mrb[0].mxu0
      %v430 = vpop.f32.mrb[0].mxu0
      %v431 = vadd.f32 %v295, %v430
      %v432 = vpop.f32.mrb[0].mxu0
      %433 = vdwg.mxu0
      %v434 = vmax.f32 %v428, 0.0
      %v435 = vmax.f32 %v431, 0.0
      %436 = vst [vmem:[#allocation14] sm:$0xff] %v434
      %437 = vst [vmem:[#allocation14 + $0x8] sm:$0xff] %v435
    $region57: #{tpu_custom_call.1} parent=1 // pred_fallthru
      _
    // Predicated region
    $region58: #{tpu_custom_call.1} parent=1 // pred_check
      _
    $region59: #{tpu_custom_call.1} parent=1 // pred_check_branch
      %439 = sbr.rel (0) target = $region61
    $region60: #{tpu_custom_call.1} parent=1 // pred_region
      %s441 = ssub.s32 256, 256
      %442 = vsyncadd [#allocation5], %s441
      %s443 = sshll.u32 [#allocation14], 4
      %s444 = int_to_ptr.vmem [resolvable:$true] %s443
      %449 = dma.vmem_to_hbm [thread:$0]  %s444, 256, %s6, [#allocation5], 128, 128, 8
    $region61: #{tpu_custom_call.1} parent=1 // pred_fallthru
      _
    // Predicated region
    $region62: #{tpu_custom_call.1} parent=1 // pred_check
      _
    $region63: #{tpu_custom_call.1} parent=1 // pred_check_branch
      %451 = sbr.rel (0) target = $region65
    $region64: #{tpu_custom_call.1} parent=1 // pred_region
      %452 = dma.done [#allocation5], 256
    $region65: #{tpu_custom_call.1} parent=1 // pred_fallthru
      _
    %453 = vsyncpa [#allocation4], 1
    %454 = vsyncpa [#allocation7], 1
    %455 = vsyncpa [#allocation10], 1
    %456 = vsyncpa [#allocation13], 1
    %457 = vsyncpa [#allocation5], 1

</llo_original>
